<compile_context>
chip_gen: v7x
topology: tpu7x:2x2x1
jax: 0.10.0
libtpu: 0.0.40
codegen_flags: <defaults>
</compile_context>

<pallas_src>
import functools

import jax
import jax.numpy as jnp
from jax import lax
from jax.experimental import pallas as pl
from jax.experimental.pallas import tpu as pltpu


def _block_kernel(x_ref, w_ref, o_ref, *, hw, hw_pad, b_blk, eps):
    """Fused conv-matmul + InstanceNorm2d + ReLU for one batch block.

    x_ref: (K_pad, B_blk*HW_pad) bf16 im2col slab (lane-dense sample bands)
    w_ref: (Cout,  K_pad)        bf16 flattened conv weight
    o_ref: (Cout,  B_blk*HW_pad) output block (bf16 by default)
    """
    # One MXU matmul for the whole batch block, f32 accumulation.
    acc = jnp.dot(w_ref[...], x_ref[...], preferred_element_type=jnp.float32)
    inv_hw = 1.0 / hw
    for b in range(b_blk):  # static, tiny (1..N); slices are lane-aligned
        sl = acc[:, b * hw_pad:(b + 1) * hw_pad]
        # Two independent lane reductions -> they pipeline through the XLU.
        # Pad lanes (if any) hold exact zeros, so sums are unaffected; divide
        # by the true HW.
        s1 = jnp.sum(sl, axis=-1, keepdims=True)
        s2 = jnp.sum(sl * sl, axis=-1, keepdims=True)
        mean = s1 * inv_hw
        var = s2 * inv_hw - mean * mean
        y = (sl - mean) * lax.rsqrt(var + eps)
        # ReLU + lane-dense store (hw_pad is a multiple of 128 -> unmasked vst).
        o_ref[:, b * hw_pad:(b + 1) * hw_pad] = (
            jnp.maximum(y, 0.0).astype(o_ref.dtype))


def _choose_batch_block(n, *, k_pad, hw_pad, cout, out_bytes,
                        budget_bytes=40 * 1024 * 1024):
    """Largest divisor of n whose per-block VMEM footprint fits the budget,
    while keeping at least 2 grid steps when n > 1 (so both v7x TensorCores
    get work).  Byte-budget based, not device-kind probing."""
    per_sample = 2 * (k_pad * hw_pad * 2)          # bf16 input, double-buffered
    per_sample += 2 * (cout * hw_pad * out_bytes)  # output, double-buffered
    per_sample += cout * hw_pad * 4                # f32 accumulator
    fixed = 2 * (cout * k_pad * 2)                 # resident bf16 weight
    best = 1
    for b in range(1, n + 1):
        if n % b:
            continue
        if n > 1 and (n // b) < 2:
            continue
        if fixed + b * per_sample <= budget_bytes:
            best = b
    return best


def up_down_block_forward(x_nchw, weight_oihw, bias=None, *, stride=1,
                          padding=1, eps=1e-5, out_dtype=jnp.bfloat16):
    """Equivalent of up_down_blocks(in_ch, out_ch, down=True, use_act=True,
    kernel_size=3, stride=1, padding=1).forward (intended `self.block(x)`)."""
    N, Cin, H, W = x_nchw.shape
    Cout, Cin_w, KH, KW = weight_oihw.shape
    assert Cin == Cin_w
    # Conv bias is mathematically cancelled by InstanceNorm2d(affine=False)'s
    # per-channel mean subtraction, so the kernel never touches it.
    del bias

    H_out = (H + 2 * padding - KH) // stride + 1
    W_out = (W + 2 * padding - KW) // stride + 1
    HW = H_out * W_out
    HW_pad = ((HW + 127) // 128) * 128      # lane-dense per-sample band
    K = Cin * KH * KW
    K_pad = ((K + 15) // 16) * 16           # bf16 sublane packing

    # ---- wrapper-side glue: pad + im2col into a (K_pad, N*HW_pad) slab ----
    # TODO(synk): move the tap contraction into the kernel for realistic
    # Generator sizes (this wrapper im2col reads ~9x the needed HBM bytes).
    x_pad = jnp.pad(x_nchw, ((0, 0), (0, 0), (padding, padding),
                             (padding, padding)))
    taps = []
    for kh in range(KH):
        for kw in range(KW):
            taps.append(x_pad[:, :,
                              kh:kh + (H_out - 1) * stride + 1:stride,
                              kw:kw + (W_out - 1) * stride + 1:stride])
    # (N, Cin, KH*KW, H_out, W_out) -> (N, K, HW); K order (cin, kh, kw)
    # matches the OIHW weight flattening below.
    x_col = jnp.stack(taps, axis=2).reshape(N, K, HW)
    if HW_pad != HW:
        x_col = jnp.pad(x_col, ((0, 0), (0, 0), (0, HW_pad - HW)))
    if K_pad != K:
        x_col = jnp.pad(x_col, ((0, 0), (0, K_pad - K), (0, 0)))
    # Lane-concatenate samples: (N, K_pad, HW_pad) -> (K_pad, N*HW_pad), bf16.
    x_wide = jnp.transpose(x_col, (1, 0, 2)).reshape(K_pad, N * HW_pad)
    x_wide = x_wide.astype(jnp.bfloat16)

    w2 = weight_oihw.reshape(Cout, K)
    if K_pad != K:
        w2 = jnp.pad(w2, ((0, 0), (0, K_pad - K)))
    w2 = w2.astype(jnp.bfloat16)

    out_bytes = jnp.dtype(out_dtype).itemsize
    B_blk = _choose_batch_block(N, k_pad=K_pad, hw_pad=HW_pad, cout=Cout,
                                out_bytes=out_bytes)
    num_blocks = N // B_blk
    blk_lanes = B_blk * HW_pad

    kernel = functools.partial(_block_kernel, hw=HW, hw_pad=HW_pad,
                               b_blk=B_blk, eps=eps)

    out_wide = pl.pallas_call(
        kernel,
        out_shape=jax.ShapeDtypeStruct((Cout, N * HW_pad), out_dtype),
        grid_spec=pltpu.PrefetchScalarGridSpec(
            num_scalar_prefetch=0,
            grid=(num_blocks,),
            in_specs=[
                pl.BlockSpec((K_pad, blk_lanes), lambda i: (0, i)),
                pl.BlockSpec((Cout, K_pad), lambda i: (0, 0)),
            ],
            out_specs=pl.BlockSpec((Cout, blk_lanes), lambda i: (0, i)),
        ),
        compiler_params=pltpu.CompilerParams(
            dimension_semantics=("parallel",),
            vmem_limit_bytes=64 * 1024 * 1024),
    )(x_wide, w2)

    # Lane-dense output (Cout, N*HW_pad) -> NCHW; pad lanes (if any) dropped.
    out = out_wide.reshape(Cout, N, HW_pad)[:, :, :HW]
    return jnp.transpose(out, (1, 0, 2)).reshape(N, Cout, H_out, W_out)


def _reference(x_nchw, weight_oihw, bias, *, stride=1, padding=1, eps=1e-5):
    """Pure-JAX reference (Conv2d -> InstanceNorm2d -> ReLU).  Conv inputs are
    cast to bf16 to match the kernel's MXU input dtype; accumulation and norm
    math stay f32."""
    y = lax.conv_general_dilated(
        x_nchw.astype(jnp.bfloat16), weight_oihw.astype(jnp.bfloat16),
        window_strides=(stride, stride),
        padding=[(padding, padding), (padding, padding)],
        dimension_numbers=("NCHW", "OIHW", "NCHW"),
        preferred_element_type=jnp.float32)
    y = y + bias.reshape(1, -1, 1, 1)   # cancelled by the IN mean subtraction
    mean = jnp.mean(y, axis=(2, 3), keepdims=True)
    var = jnp.mean((y - mean) ** 2, axis=(2, 3), keepdims=True)
    y = (y - mean) * lax.rsqrt(var + eps)
    return jnp.maximum(y, 0.0)


if __name__ == "__main__":
    # Small shapes consistent with the module: batch=2, in_ch=4, out_ch=8,
    # spatial=16, kernel_size=3, stride=1, padding=1.
    N, Cin, H, W = 2, 4, 16, 16
    Cout, KH, KW = 8, 3, 3

    key = jax.random.PRNGKey(0)
    kx, kw, kb = jax.random.split(key, 3)
    x = jax.random.normal(kx, (N, Cin, H, W), dtype=jnp.float32)
    # Deterministic parameter init (Conv2d-like uniform fan-in scale).
    fan_in = Cin * KH * KW
    bound = 1.0 / (fan_in ** 0.5)
    weight = jax.random.uniform(kw, (Cout, Cin, KH, KW),
                                minval=-bound, maxval=bound, dtype=jnp.float32)
    bias = jax.random.uniform(kb, (Cout,), minval=-bound, maxval=bound,
                              dtype=jnp.float32)

    out = up_down_block_forward(x, weight, bias, stride=1, padding=1)
    out = jax.block_until_ready(out)

    ref = jax.block_until_ready(_reference(x, weight, bias, stride=1, padding=1))
    assert out.shape == (N, Cout, H, W)
    assert out.dtype == jnp.bfloat16
    assert jnp.allclose(out.astype(jnp.float32), ref, atol=2e-2, rtol=2e-2)

    print("KERNEL_OK")
</pallas_src>

<mosaic_0001>
module attributes {stable_mosaic.version = 11 : i64} {
  func.func @_block_kernel(%arg0: i32, %arg1: memref<48x256xbf16, #tpu.memory_space<vmem>>, %arg2: memref<8x48xbf16, #tpu.memory_space<vmem>>, %arg3: memref<8x256xbf16, #tpu.memory_space<vmem>>) attributes {dimension_semantics = [#tpu.dimension_semantics<parallel>], iteration_bounds = array<i64: 2>, scalar_prefetch = 0 : i64, scratch_operands = 0 : i64, tpu.core_type = #tpu.core_type<tc>, window_params = [{transform_indices = @transform_0, window_bounds = array<i64: 48, 256>}, {pipeline_mode = #tpu.pipeline_mode<synchronous>, transform_indices = @transform_1, window_bounds = array<i64: 8, 48>}, {transform_indices = @transform_2, window_bounds = array<i64: 8, 256>}]} {
    %c0 = arith.constant 0 : index
    %c0_0 = arith.constant 0 : index
    %0 = vector.load %arg2[%c0, %c0_0] : memref<8x48xbf16, #tpu.memory_space<vmem>>, vector<8x48xbf16>
    %c0_1 = arith.constant 0 : index
    %c0_2 = arith.constant 0 : index
    %1 = vector.load %arg1[%c0_1, %c0_2] : memref<48x256xbf16, #tpu.memory_space<vmem>>, vector<48x256xbf16>
    %cst = arith.constant dense<0.000000e+00> : vector<8x256xf32>
    %2 = tpu.matmul %0, %1, %cst {dimension_numbers = #tpu.dot_dimension_numbers<[1], [0], [0], [1], [0, 0, 1, 1], [], []>} : vector<8x48xbf16>, vector<48x256xbf16>, vector<8x256xf32> -> vector<8x256xf32>
    %cst_3 = arith.constant dense<0.000000e+00> : vector<8xf32>
    %3 = vector.multi_reduction <add>, %2, %cst_3 [1] : vector<8x256xf32> to vector<8xf32>
    %4 = vector.shape_cast %3 : vector<8xf32> to vector<8x1xf32>
    %5 = arith.mulf %2, %2 : vector<8x256xf32>
    %cst_4 = arith.constant dense<0.000000e+00> : vector<8xf32>
    %6 = vector.multi_reduction <add>, %5, %cst_4 [1] : vector<8x256xf32> to vector<8xf32>
    %7 = vector.shape_cast %6 : vector<8xf32> to vector<8x1xf32>
    %cst_5 = arith.constant 3.906250e-03 : f32
    %8 = vector.broadcast %cst_5 : f32 to vector<8x1xf32>
    %9 = arith.mulf %4, %8 : vector<8x1xf32>
    %cst_6 = arith.constant 3.906250e-03 : f32
    %10 = vector.broadcast %cst_6 : f32 to vector<8x1xf32>
    %11 = arith.mulf %7, %10 : vector<8x1xf32>
    %12 = arith.mulf %9, %9 : vector<8x1xf32>
    %13 = arith.subf %11, %12 : vector<8x1xf32>
    %14 = vector.broadcast %9 : vector<8x1xf32> to vector<8x256xf32>
    %15 = arith.subf %2, %14 : vector<8x256xf32>
    %cst_7 = arith.constant 9.99999974E-6 : f32
    %16 = vector.broadcast %cst_7 : f32 to vector<8x1xf32>
    %17 = arith.addf %13, %16 : vector<8x1xf32>
    %18 = math.rsqrt %17 : vector<8x1xf32>
    %19 = vector.broadcast %18 : vector<8x1xf32> to vector<8x256xf32>
    %20 = arith.mulf %15, %19 : vector<8x256xf32>
    %cst_8 = arith.constant 0.000000e+00 : f32
    %21 = vector.broadcast %cst_8 : f32 to vector<8x256xf32>
    %22 = arith.maximumf %20, %21 : vector<8x256xf32>
    %23 = arith.truncf %22 : vector<8x256xf32> to vector<8x256xbf16>
    %c0_9 = arith.constant 0 : index
    %c0_10 = arith.constant 0 : index
    %24 = vector.load %arg3[%c0_9, %c0_10] : memref<8x256xbf16, #tpu.memory_space<vmem>>, vector<8x256xbf16>
    tpu.vector_store %arg3[%c0_9, %c0_10], %23 {strides = array<i32>} : memref<8x256xbf16, #tpu.memory_space<vmem>>, vector<8x256xbf16>,
    return
  }
  func.func @transform_0(%arg0: i32) -> (i32, i32) {
    %c0_i32 = arith.constant 0 : i32
    %c0_i32_0 = arith.constant 0 : i32
    return %c0_i32, %arg0 : i32, i32
  }
  func.func @transform_1(%arg0: i32) -> (i32, i32) {
    %c0_i32 = arith.constant 0 : i32
    %c0_i32_0 = arith.constant 0 : i32
    %c0_i32_1 = arith.constant 0 : i32
    return %c0_i32, %c0_i32_0 : i32, i32
  }
  func.func @transform_2(%arg0: i32) -> (i32, i32) {
    %c0_i32 = arith.constant 0 : i32
    %c0_i32_0 = arith.constant 0 : i32
    return %c0_i32, %arg0 : i32, i32
  }
}

</mosaic_0001>

<llo_original>
// kernel: tpu_custom_call.1
$region0: #{tpu_custom_call.1}
  #allocation0 [shape = 'u32[]', space=smem, size = 0x4, offset = 0x4, fixed_abs, tag = 'smem constant byte address 0x4 - core index']
  #allocation1 [shape = 'u32[144,128]{1,0:T(1,128)}', space=vmem, size = 0x12000, scoped, tag = 'internal scratch']
  %s0 = inlined_call_operand.hbm [shape: bf16[48,512], index: 0, kind: input, shape index: {}]
  %s1 = inlined_call_operand.hbm [shape: bf16[8,48], index: 1, kind: input, shape index: {}]
  %s2 = inlined_call_operand.hbm [shape: bf16[8,512], index: 2, kind: output, shape index: {}]
  %s3 = sld [smem:[#allocation0]]
  $region49: #{tpu_custom_call.1} parent=0
    _
  %s5 = ssub.s32 1, %s3
  %s6 = scalar_select 0, %s5, %s3
  $region1: #{tpu_custom_call.1} parent=0
    #allocation2 [shape = 'u8[49152]{0}', space=vmem, size = 0xc000, scoped, tag = 'input window, operand 0']
    #allocation3 [shape = 's32[2]{0}', space=sflag, size = 0x8, scoped, tag = 'scoped memory for tpu_custom_call.1']
    #allocation4 [shape = 's32[2]{0}', space=sflag, size = 0x8, scoped, tag = 'scoped memory for tpu_custom_call.1']
    #allocation5 [shape = 'u8[2048]{0}', space=vmem, size = 0x800, scoped, tag = 'input window, operand 1, single buffered']
    #allocation6 [shape = 's32[1]{0}', space=sflag, size = 0x4, scoped, tag = 'scoped memory for tpu_custom_call.1']
    #allocation7 [shape = 'u8[8192]{0}', space=vmem, size = 0x2000, scoped, tag = 'output window, operand 0']
    %7 = vsyncpa [#allocation3], 0
    %s8 = scalar_lea.sflag [#allocation3], 1
    %9 = vsyncpa %s8, 0
    %10 = vsyncpa [#allocation6], 0
    %11 = vsyncpa [#allocation4], 0
    %s12 = scalar_lea.sflag [#allocation4], 1
    %13 = vsyncpa %s12, 0
    loop: start=0, step=1, limit=4
    $region2: #{tpu_custom_call.1} parent=1 // loop_pre_header
      _
    $region3: #{tpu_custom_call.1} parent=1 // loop_header
      %s15 = sphi 0, %s19
      %p16 = scmp.ge.s32.totalorder %s15, 4
      %s25 = sphi 0, %s27
      %s28 = sphi 0, %s25
      %s29 = sphi 0, %s28
      %s45 = sphi 0, %s29
      %s49 = sphi 0, %s49
      %s51 = sphi 0, %s49
      %s52 = sphi 0, %s51
      %s66 = sphi 0, %s52
      %s72 = sphi 0, %s74
      %s75 = sphi 0, %s72
      %s76 = sphi 0, %s75
      %s92 = sphi 0, %s76
    $region4: #{tpu_custom_call.1} parent=1 // loop_header_branch
      %18 = sbr.rel (%p16) target = $region8
    $region5: #{tpu_custom_call.1} parent=1 // loop_body
      %s20 = ssub.s32 %s15, 1
      %s21 = ssub.s32 %s15, 2
      %s22 = sadd.s32 %s15, 1
      %s23 = ssub.s32 %s15, %s22
      %p24 = scmp.eq.s32.totalorder %s23, 0
      %s26 = sadd.s32 %s25, 1
      %s27 = scalar_select %p24, %s25, %s26
      %p30 = pneg %p24
      %p31 = scmp.eq.s32.totalorder %s15, 1
      %p32 = por %p30, %p31
      %p33 = scmp.ne.s32.totalorder %s25, %s28
      %p34 = scmp.eq.s32.totalorder %s15, 0
      %p35 = por %p33, %p34
      %p36 = scmp.ne.s32.totalorder %s25, %s28
      %p37 = scmp.eq.s32.totalorder %s20, 1
      %p38 = por %p36, %p37
      %p39 = scmp.ne.s32.totalorder %s28, %s29
      %p40 = scmp.eq.s32.totalorder %s20, 0
      %p41 = por %p39, %p40
      %p42 = scmp.ne.s32.totalorder %s28, %s29
      %p43 = scmp.eq.s32.totalorder %s21, 1
      %p44 = por %p42, %p43
      %p46 = scmp.ne.s32.totalorder %s29, %s45
      %p47 = scmp.eq.s32.totalorder %s21, 0
      %p48 = por %p46, %p47
      %s50 = sadd.s32 %s49, 1
      %p53 = scmp.eq.s32.totalorder %s15, 1
      %p54 = scmp.ne.s32.totalorder %s49, %s51
      %p55 = scmp.eq.s32.totalorder %s15, 0
      %p56 = por %p54, %p55
      %p57 = scmp.ne.s32.totalorder %s49, %s51
      %p58 = scmp.eq.s32.totalorder %s20, 1
      %p59 = por %p57, %p58
      %p60 = scmp.ne.s32.totalorder %s51, %s52
      %p61 = scmp.eq.s32.totalorder %s20, 0
      %p62 = por %p60, %p61
      %p63 = scmp.ne.s32.totalorder %s51, %s52
      %p64 = scmp.eq.s32.totalorder %s21, 1
      %p65 = por %p63, %p64
      %p67 = scmp.ne.s32.totalorder %s52, %s66
      %p68 = scmp.eq.s32.totalorder %s21, 0
      %p69 = por %p67, %p68
      %s70 = ssub.s32 %s15, %s22
      %p71 = scmp.eq.s32.totalorder %s70, 0
      %s73 = sadd.s32 %s72, 1
      %s74 = scalar_select %p71, %s72, %s73
      %p77 = pneg %p71
      %p78 = scmp.eq.s32.totalorder %s15, 1
      %p79 = por %p77, %p78
      %p80 = scmp.ne.s32.totalorder %s72, %s75
      %p81 = scmp.eq.s32.totalorder %s15, 0
      %p82 = por %p80, %p81
      %p83 = scmp.ne.s32.totalorder %s72, %s75
      %p84 = scmp.eq.s32.totalorder %s20, 1
      %p85 = por %p83, %p84
      %p86 = scmp.ne.s32.totalorder %s75, %s76
      %p87 = scmp.eq.s32.totalorder %s20, 0
      %p88 = por %p86, %p87
      %p89 = scmp.ne.s32.totalorder %s75, %s76
      %p90 = scmp.eq.s32.totalorder %s21, 1
      %p91 = por %p89, %p90
      %p93 = scmp.ne.s32.totalorder %s76, %s92
      %p94 = scmp.eq.s32.totalorder %s21, 0
      %p95 = por %p93, %p94
      %p96 = scmp.le.s32.totalorder 1, %s15
      %p97 = scmp.lt.s32.totalorder %s15, 3
      %p98 = pnand %p96, %p97
      %p99 = pneg %p98
      // Predicated region
      $region9: #{tpu_custom_call.1} parent=5 // pred_check
        _
      $region10: #{tpu_custom_call.1} parent=5 // pred_check_branch
        %101 = sbr.rel (%p98) target = $region12
      $region11: #{tpu_custom_call.1} parent=5 // pred_region
        %s102 = ssub.s32 %s15, 1
        // Predicated region
        $region13: #{tpu_custom_call.1} parent=11 // pred_check
          %p103 = pneg %p62
        $region14: #{tpu_custom_call.1} parent=11 // pred_check_branch
          %105 = sbr.rel (%p103) target = $region16
        $region15: #{tpu_custom_call.1} parent=11 // pred_region
          %s107 = ssub.s32 64, 64
          %108 = vsyncadd [#allocation6], %s107
          %s110 = sshll.u32 [#allocation5], 4
          %s111 = int_to_ptr.vmem [resolvable:$true] %s110
          %113 = dma.hbm_to_vmem [thread:$0]  %s1, 64, %s111, [#allocation6]
        $region16: #{tpu_custom_call.1} parent=11 // pred_fallthru
          _
      $region12: #{tpu_custom_call.1} parent=5 // pred_fallthru
        _
      %p114 = scmp.lt.s32.totalorder %s15, 2
      // Predicated region
      $region17: #{tpu_custom_call.1} parent=5 // pred_check
        %p115 = pneg %p114
      $region18: #{tpu_custom_call.1} parent=5 // pred_check_branch
        %117 = sbr.rel (%p115) target = $region20
      $region19: #{tpu_custom_call.1} parent=5 // pred_region
        // Predicated region
        $region21: #{tpu_custom_call.1} parent=19 // pred_check
          %p118 = pneg %p35
        $region22: #{tpu_custom_call.1} parent=19 // pred_check_branch
          %120 = sbr.rel (%p118) target = $region24
        $region23: #{tpu_custom_call.1} parent=19 // pred_region
          %s121 = sand.u32 %s25, 1
          %s122 = scalar_lea.sflag [#allocation3], %s121
          %s123 = sand.u32 %s25, 1
          %s124 = smul.addr %s123, 48
          %s125 = scalar_lea.vmem [#allocation2], %s124
          %s126 = smul.u32 2, %s15
          %s128 = ssub.s32 768, 768
          %129 = vsyncadd %s122, %s128
          %s130 = smul.addr %s126, 64
          %s131 = scalar_lea.hbm %s0, %s130
          %s132 = sshll.u32 %s125, 4
          %s133 = int_to_ptr.vmem [resolvable:$true] %s132
          %138 = dma.hbm_to_vmem [thread:$0]  %s131, 768, %s133, %s122, 256, 128, 8
        $region24: #{tpu_custom_call.1} parent=19 // pred_fallthru
          _
      $region20: #{tpu_custom_call.1} parent=5 // pred_fallthru
        _
      %p139 = scmp.le.s32.totalorder 1, %s15
      %p140 = scmp.lt.s32.totalorder %s15, 3
      %p141 = pnand %p139, %p140
      %p142 = pneg %p141
      // Predicated region
      $region25: #{tpu_custom_call.1} parent=5 // pred_check
        _
      $region26: #{tpu_custom_call.1} parent=5 // pred_check_branch
        %144 = sbr.rel (%p141) target = $region28
      $region27: #{tpu_custom_call.1} parent=5 // pred_region
        %s145 = ssub.s32 %s15, 1
        %s146 = sand.u32 %s28, 1
        %s147 = scalar_lea.sflag [#allocation3], %s146
        %s148 = sand.u32 %s28, 1
        %s149 = smul.addr %s148, 48
        %s150 = scalar_lea.vmem [#allocation2], %s149
        // Predicated region
        $region29: #{tpu_custom_call.1} parent=27 // pred_check
          %p151 = pneg %p41
        $region30: #{tpu_custom_call.1} parent=27 // pred_check_branch
          %153 = sbr.rel (%p151) target = $region32
        $region31: #{tpu_custom_call.1} parent=27 // pred_region
          %154 = dma.done %s147, 768
        $region32: #{tpu_custom_call.1} parent=27 // pred_fallthru
          _
        // Predicated region
        $region33: #{tpu_custom_call.1} parent=27 // pred_check
          %p155 = pneg %p62
        $region34: #{tpu_custom_call.1} parent=27 // pred_check_branch
          %157 = sbr.rel (%p155) target = $region36
        $region35: #{tpu_custom_call.1} parent=27 // pred_region
          %158 = dma.done [#allocation6], 64
        $region36: #{tpu_custom_call.1} parent=27 // pred_fallthru
          _
        %s159 = sand.u32 %s28, 1
        %s160 = scalar_lea.sflag [#allocation3], %s159
        %s161 = sand.u32 %s28, 1
        %s162 = smul.addr %s161, 48
        %s163 = scalar_lea.vmem [#allocation2], %s162
        %p164 = pneg %p41
        %p165 = pneg %p38
        %p166 = pneg %p62
        %p167 = pneg %p59
        %p168 = pneg %p88
        %p169 = pneg %p85
        %s170 = sand.u32 %s75, 1
        %s171 = scalar_lea.sflag [#allocation4], %s170
        %s172 = sand.u32 %s75, 1
        %s173 = smul.addr %s172, 8
        %s174 = scalar_lea.vmem [#allocation7], %s173
        %s175 = smul.u32 2, %s20
        %s176 = smul.u32 2, %s20
        %v178 = vld [vmem:[#allocation5] sm:$0xf]
        %v179 = vld [vmem:[%s150] sm:$0xff]
        %v180 = vld [vmem:[%s150 + $0x8] sm:$0xff]
        %v181 = vld [vmem:[%s150 + $0x10] sm:$0xff]
        %v182 = vld [vmem:[%s150 + $0x18] sm:$0xff]
        %v183 = vld [vmem:[%s150 + $0x20] sm:$0xff]
        %v184 = vld [vmem:[%s150 + $0x28] sm:$0xff]
        %v191 = vunpack.c.l.b16 %v179
        %v192 = vunpack.c.h.b16 %v179
        %v193 = vunpack.c.l.b16 %v180
        %v194 = vunpack.c.h.b16 %v180
        %v195 = vunpack.c.l.b16 %v181
        %v196 = vunpack.c.h.b16 %v181
        %v197 = vunpack.c.l.b16 %v182
        %v198 = vunpack.c.h.b16 %v182
        %v199 = vunpack.c.l.b16 %v183
        %v200 = vunpack.c.h.b16 %v183
        %v201 = vunpack.c.l.b16 %v184
        %v202 = vunpack.c.h.b16 %v184
        %v203 = vpack.c.b16 %v193, %v191
        %v204 = vpack.c.b16 %v194, %v192
        %v205 = vpack.c.b16 %v197, %v195
        %v206 = vpack.c.b16 %v198, %v196
        %v207 = vpack.c.b16 %v201, %v199
        %v208 = vpack.c.b16 %v202, %v200
        %vm215 = vcmask 392192
        %v217 = vsel %vm215, %v178, 0
        %219 = vmatprep.subr.bf16.mxu0 %v204
        %220 = vmatpush1.bf16.msra.mxu0 %v203
        %221 = vmatprep.subr.bf16.mxu0 %v206
        %222 = vmatpush1.bf16.msra.mxu0 %v205
        %223 = vmatprep.subr.bf16.mxu0 %v208
        %224 = vmatpush1.bf16.msra.mxu0 %v207
        %225 = vmatprep.subr.bf16.mxu0 0
        %226 = vmatpush1.bf16.msra.mxu0 0
        %227 = vmatprep.subr.bf16.mxu0 0
        %228 = vmatpush1.bf16.msra.mxu0 0
        %229 = vmatprep.subr.bf16.mxu0 0
        %230 = vmatpush1.bf16.msra.mxu0 0
        %231 = vmatprep.subr.bf16.mxu0 0
        %232 = vmatpush1.bf16.msra.mxu0 0
        %233 = vmatprep.subr.bf16.mxu0 0
        %234 = vmatpush1.bf16.msra.mxu0 0
        %235 = vmatprep.subr.bf16.mxu0 0
        %236 = vmatpush1.bf16.msra.mxu0 0
        %237 = vmatprep.subr.bf16.mxu0 0
        %238 = vmatpush1.bf16.msra.mxu0 0
        %239 = vmatprep.subr.bf16.mxu0 0
        %240 = vmatpush1.bf16.msra.mxu0 0
        %241 = vmatprep.subr.bf16.mxu0 0
        %242 = vmatpush1.bf16.msra.mxu0 0
        %243 = vmatprep.subr.bf16.mxu0 0
        %244 = vmatpush1.bf16.msra.mxu0 0
        %245 = vmatprep.subr.bf16.mxu0 0
        %246 = vmatpush1.bf16.msra.mxu0 0
        %247 = vmatprep.subr.bf16.mxu0 0
        %248 = vmatpush1.bf16.msra.mxu0 0
        %249 = vmatprep.subr.bf16.mxu0 0
        %250 = vmatpush1.bf16.msra.mxu0 0
        %251 = vmatprep.mubr.bf16.mxu0 0
        %252 = vmatmul.mubr.bf16.gmra.mrb[0].mxu0 %v217
        %v253 = vpop.f32.mrb[0].mxu0
        %v254 = vadd.f32 0.0, %v253
        %v255 = vpop.f32.mrb[0].mxu0
        %v256 = vadd.f32 0.0, %v255
        %v257 = vpop.f32.mrb[0].mxu0
        %v258 = vpop.f32.mrb[0].mxu0
        %259 = vdwg.mxu0
        %v260 = vadd.f32 %v254, %v256
        %261 = vadd.xlane.f32.xlu0 %v260
        %v262 = vpop.xlane.xlu0 %261
        %v263 = vmul.f32 %v254, %v254
        %v264 = vmul.f32 %v256, %v256
        %v265 = vadd.f32 %v263, %v264
        %266 = vadd.xlane.f32.xlu0 %v265
        %v267 = vpop.xlane.xlu0 %266
        %v268 = vmul.f32 %v262, 0.00390625
        %v269 = vmul.f32 %v267, 0.00390625
        %v270 = vmul.f32 %v268, %v268
        %v271 = vsub.f32 %v269, %v270
        %v272 = vsub.f32 %v254, %v268
        %v273 = vsub.f32 %v256, %v268
        %v274 = vadd.f32 %v271, 1e-05
        %v275 = vrsqrt.pop %v274
        %v276 = vmul.f32 %v272, %v275
        %v277 = vmul.f32 %v273, %v275
        %v278 = vmax.f32 %v276, 0.0
        %v279 = vmax.f32 %v277, 0.0
        %v280 = vpack.c.bf16 %v278, %v278
        %v281 = vpack.c.bf16 %v279, %v279
        %v284 = vunpack.c.l.b16 %v280
        %v285 = vunpack.c.l.b16 %v281
        %v286 = vpack.c.b16 %v285, %v284
        %288 = vst [vmem:[%s174] sm:$0xff] %v286
        %s289 = sand.u32 %s75, 1
        %s290 = scalar_lea.sflag [#allocation4], %s289
        %s291 = sand.u32 %s75, 1
        %s292 = smul.addr %s291, 8
        %s293 = scalar_lea.vmem [#allocation7], %s292
        // Predicated region
        $region37: #{tpu_custom_call.1} parent=27 // pred_check
          %p294 = pneg %p85
        $region38: #{tpu_custom_call.1} parent=27 // pred_check_branch
          %296 = sbr.rel (%p294) target = $region40
        $region39: #{tpu_custom_call.1} parent=27 // pred_region
          %s297 = smul.u32 2, %s20
          %s299 = ssub.s32 128, 128
          %300 = vsyncadd %s290, %s299
          %s301 = smul.addr %s297, 64
          %s302 = scalar_lea.hbm %s2, %s301
          %s304 = sshll.u32 %s293, 4
          %s305 = int_to_ptr.vmem [resolvable:$true] %s304
          %307 = dma.vmem_to_hbm [thread:$0]  %s305, 128, %s302, %s290
        $region40: #{tpu_custom_call.1} parent=27 // pred_fallthru
          _
      $region28: #{tpu_custom_call.1} parent=5 // pred_fallthru
        _
      %p308 = scmp.le.s32.totalorder 2, %s15
      // Predicated region
      $region41: #{tpu_custom_call.1} parent=5 // pred_check
        %p309 = pneg %p308
      $region42: #{tpu_custom_call.1} parent=5 // pred_check_branch
        %311 = sbr.rel (%p309) target = $region44
      $region43: #{tpu_custom_call.1} parent=5 // pred_region
        %s312 = ssub.s32 %s15, 2
        // Predicated region
        $region45: #{tpu_custom_call.1} parent=43 // pred_check
          %p313 = pneg %p91
        $region46: #{tpu_custom_call.1} parent=43 // pred_check_branch
          %315 = sbr.rel (%p313) target = $region48
        $region47: #{tpu_custom_call.1} parent=43 // pred_region
          %s316 = sand.u32 %s76, 1
          %s317 = scalar_lea.sflag [#allocation4], %s316
          %s318 = sand.u32 %s76, 1
          %s319 = smul.addr %s318, 8
          %s320 = scalar_lea.vmem [#allocation7], %s319
          %321 = dma.done %s317, 128
        $region48: #{tpu_custom_call.1} parent=43 // pred_fallthru
          _
      $region44: #{tpu_custom_call.1} parent=5 // pred_fallthru
        _
    $region6: #{tpu_custom_call.1} parent=1 // loop_footer
      %s19 = sadd.s32 1, %s15
    $region7: #{tpu_custom_call.1} parent=1 // loop_footer_branch
      %14 = sbr.rel target = $region3
    $region8: #{tpu_custom_call.1} parent=1 // loop_exit
      _
    %322 = vsyncpa [#allocation3], 1
    %s323 = scalar_lea.sflag [#allocation3], 1
    %324 = vsyncpa %s323, 1
    %325 = vsyncpa [#allocation6], 1
    %326 = vsyncpa [#allocation4], 1
    %s327 = scalar_lea.sflag [#allocation4], 1
    %328 = vsyncpa %s327, 1

</llo_original>
